<compile_context>
chip_gen: v7x
topology: tpu7x:2x2x1
jax: 0.10.0
libtpu: 0.0.40
codegen_flags: <defaults>
</compile_context>

<pallas_src>
import functools

import jax
import jax.numpy as jnp
from jax import lax
from jax.experimental import pallas as pl
from jax.experimental.pallas import tpu as pltpu

BN_EPS = 1e-5
LANE = 128
SUBLANE_BF16 = 16           # bf16 sublane packing: keep batch tiles 16-aligned


def _round_up(n, m):
    return ((n + m - 1) // m) * m


# -----------------------------------------------------------------------------
# Kernels
# -----------------------------------------------------------------------------
def _fused_small_kernel(x_ref, w1_ref, b1_ref, gamma_ref, beta_ref,
                        w2_ref, b2_ref, out_ref, *, batch):
    """Fast path: whole (padded) batch resident in VMEM, single invocation."""
    h = jnp.dot(x_ref[...], w1_ref[...], preferred_element_type=jnp.float32)
    h = jnp.maximum(h + b1_ref[...], 0.0)

    # Training-mode BatchNorm statistics over the true batch rows only
    # (padding rows have x == 0 but h == relu(b1) != 0, so they must be masked).
    row = lax.broadcasted_iota(jnp.int32, h.shape, 0)
    valid = row < batch
    inv_b = jnp.float32(1.0 / batch)
    mean = jnp.sum(jnp.where(valid, h, 0.0), axis=0, keepdims=True) * inv_b
    diff = jnp.where(valid, h - mean, 0.0)     # centered second moment
    var = jnp.sum(diff * diff, axis=0, keepdims=True) * inv_b

    scale = gamma_ref[...] * lax.rsqrt(var + BN_EPS)
    shift = beta_ref[...] - mean * scale
    hn = h * scale + shift
    out_ref[...] = (jnp.dot(hn.astype(jnp.bfloat16), w2_ref[...],
                            preferred_element_type=jnp.float32) + b2_ref[...])


def _stats_kernel(x_ref, w1_ref, b1_ref, stats_ref, *, batch, tile_b):
    """Tiled pass 1: per-tile partial sum / sum-of-squares of ReLU(x@W1+b1).

    The batch reduction is an f32 cross-sublane (XLU) reduce: the XLU slot is
    otherwise idle here and this avoids f32 MXU passes (important on v5e).
    """
    i = pl.program_id(0)
    h = jnp.dot(x_ref[...], w1_ref[...], preferred_element_type=jnp.float32)
    h = jnp.maximum(h + b1_ref[...], 0.0)
    row = i * tile_b + lax.broadcasted_iota(jnp.int32, h.shape, 0)
    h = jnp.where(row < batch, h, 0.0)          # exclude zero-padded batch rows
    s = jnp.sum(h, axis=0, keepdims=True)       # (1, hid_p) f32
    ss = jnp.sum(h * h, axis=0, keepdims=True)  # (1, hid_p) f32
    stats_ref[0, :, :] = jnp.concatenate([s, ss], axis=0)


def _apply_kernel(x_ref, w1_ref, b1_ref, w2f_ref, b2f_ref, out_ref):
    """Tiled pass 2: ReLU(x@W1+b1) @ W2' + b2' (BatchNorm folded into W2'/b2')."""
    h = jnp.dot(x_ref[...], w1_ref[...], preferred_element_type=jnp.float32)
    h = jnp.maximum(h + b1_ref[...], 0.0)
    out_ref[...] = (jnp.dot(h.astype(jnp.bfloat16), w2f_ref[...],
                            preferred_element_type=jnp.float32) + b2f_ref[...])


# -----------------------------------------------------------------------------
# Wrapper
# -----------------------------------------------------------------------------
def digitnn_forward(x, w1, b1, gamma, beta, w2, b2, *,
                    tile_b=512, max_fast_rows=2048):
    """x: (B, input_dim); w1: (in, hid); w2: (hid, out). Returns (B, out)."""
    x = jnp.asarray(x)
    B, in_dim = x.shape
    hid = w1.shape[1]
    out_dim = w2.shape[1]

    in_p = _round_up(in_dim, LANE)
    hid_p = _round_up(hid, LANE)
    out_p = _round_up(out_dim, LANE)

    f32, bf16 = jnp.float32, jnp.bfloat16

    # Lane-dense zero-padded parameters (built once). MXU operands are bf16
    # with f32 accumulation; biases / BN params stay f32.
    w1p = jnp.zeros((in_p, hid_p), bf16).at[:in_dim, :hid].set(
        jnp.asarray(w1, f32).astype(bf16))
    w2p = jnp.zeros((hid_p, out_p), f32).at[:hid, :out_dim].set(
        jnp.asarray(w2, f32))
    b1p = jnp.zeros((1, hid_p), f32).at[:, :hid].set(jnp.reshape(b1, (1, -1)))
    gp = jnp.zeros((1, hid_p), f32).at[:, :hid].set(jnp.reshape(gamma, (1, -1)))
    bp = jnp.zeros((1, hid_p), f32).at[:, :hid].set(jnp.reshape(beta, (1, -1)))
    b2p = jnp.zeros((1, out_p), f32).at[:, :out_dim].set(jnp.reshape(b2, (1, -1)))

    # ----------------------- fast path (everything in VMEM) ------------------
    b_fast = _round_up(B, SUBLANE_BF16)
    if b_fast <= max_fast_rows:
        xp = jnp.zeros((b_fast, in_p), bf16).at[:B, :in_dim].set(
            jnp.asarray(x, f32).astype(bf16))
        full = lambda shape: pl.BlockSpec(shape, lambda i: (0, 0))
        out_padded = pl.pallas_call(
            functools.partial(_fused_small_kernel, batch=B),
            out_shape=jax.ShapeDtypeStruct((b_fast, out_p), f32),
            grid_spec=pltpu.PrefetchScalarGridSpec(
                num_scalar_prefetch=0,
                grid=(1,),
                in_specs=[
                    full((b_fast, in_p)),    # x
                    full((in_p, hid_p)),     # W1
                    full((1, hid_p)),        # b1
                    full((1, hid_p)),        # gamma
                    full((1, hid_p)),        # beta
                    full((hid_p, out_p)),    # W2
                    full((1, out_p)),        # b2
                ],
                out_specs=full((b_fast, out_p))),
            compiler_params=pltpu.CompilerParams(
                dimension_semantics=("arbitrary",),
                vmem_limit_bytes=32 * 1024 * 1024),
            cost_estimate=pl.CostEstimate(
                flops=2 * b_fast * hid_p * (in_p + out_p),
                transcendentals=hid_p,
                bytes_accessed=(2 * b_fast * in_p + 4 * b_fast * out_p
                                + 2 * in_p * hid_p + 2 * hid_p * out_p)),
        )(xp, w1p, b1p, gp, bp, w2p.astype(bf16), b2p)
        return out_padded[:B, :out_dim]

    # ----------------- tiled path: two parallel-grid pallas_calls ------------
    tile_b = max(SUBLANE_BF16,
                 _round_up(min(tile_b, _round_up(B, SUBLANE_BF16)), SUBLANE_BF16))
    b_p = _round_up(B, tile_b)
    n_tiles = b_p // tile_b

    xp = jnp.zeros((b_p, in_p), bf16).at[:B, :in_dim].set(
        jnp.asarray(x, f32).astype(bf16))

    resident = lambda shape: pl.BlockSpec(shape, lambda i: (0, 0))

    # Pass 1: per-tile partial BatchNorm statistics.
    stats = pl.pallas_call(
        functools.partial(_stats_kernel, batch=B, tile_b=tile_b),
        out_shape=jax.ShapeDtypeStruct((n_tiles, 2, hid_p), f32),
        grid_spec=pltpu.PrefetchScalarGridSpec(
            num_scalar_prefetch=0,
            grid=(n_tiles,),
            in_specs=[
                pl.BlockSpec((tile_b, in_p), lambda i: (i, 0)),   # x tile
                resident((in_p, hid_p)),                          # W1
                resident((1, hid_p)),                             # b1
            ],
            out_specs=pl.BlockSpec((1, 2, hid_p), lambda i: (i, 0, 0))),
        compiler_params=pltpu.CompilerParams(
            dimension_semantics=("parallel",)),
        cost_estimate=pl.CostEstimate(
            flops=2 * b_p * in_p * hid_p,
            transcendentals=0,
            bytes_accessed=(2 * b_p * in_p + 2 * in_p * hid_p
                            + 4 * n_tiles * 2 * hid_p)),
    )(xp, w1p, b1p)

    # Fold BatchNorm (training-mode, biased variance) into layer2 — tiny XLA ops.
    total = jnp.sum(stats, axis=0)                  # (2, hid_p)
    mean = total[0] / B
    var = total[1] / B - mean * mean                # biased var (matches PyTorch fwd)
    scale = gp[0] * lax.rsqrt(var + BN_EPS)         # (hid_p,)   zero on padded lanes
    shift = bp[0] - mean * scale                    # (hid_p,)
    w2f = (w2p * scale[:, None]).astype(bf16)       # W2' = diag(scale) @ W2
    b2f = b2p + shift[None, :] @ w2p                # b2' = b2 + shift @ W2

    # Pass 2: apply layer1 + folded BN + layer2.
    out_padded = pl.pallas_call(
        _apply_kernel,
        out_shape=jax.ShapeDtypeStruct((b_p, out_p), f32),
        grid_spec=pltpu.PrefetchScalarGridSpec(
            num_scalar_prefetch=0,
            grid=(n_tiles,),
            in_specs=[
                pl.BlockSpec((tile_b, in_p), lambda i: (i, 0)),   # x tile
                resident((in_p, hid_p)),                          # W1
                resident((1, hid_p)),                             # b1
                resident((hid_p, out_p)),                         # W2'
                resident((1, out_p)),                             # b2'
            ],
            out_specs=pl.BlockSpec((tile_b, out_p), lambda i: (i, 0))),
        compiler_params=pltpu.CompilerParams(
            dimension_semantics=("parallel",)),
        cost_estimate=pl.CostEstimate(
            flops=2 * b_p * hid_p * (in_p + out_p),
            transcendentals=0,
            bytes_accessed=(2 * b_p * in_p + 4 * b_p * out_p
                            + 2 * hid_p * (in_p + out_p))),
    )(xp, w1p, b1p, w2f, b2f)

    return out_padded[:B, :out_dim]


# -----------------------------------------------------------------------------
# Parameters / reference
# -----------------------------------------------------------------------------
def init_params(key, input_dim, num_hidden, output_dim):
    """Deterministic synthetic params (PyTorch-like uniform fan-in init)."""
    k1, k2, k3, k4 = jax.random.split(key, 4)
    bound1 = 1.0 / (input_dim ** 0.5)
    bound2 = 1.0 / (num_hidden ** 0.5)
    # stored transposed relative to PyTorch: (in, out)
    w1 = jax.random.uniform(k1, (input_dim, num_hidden), jnp.float32,
                            -bound1, bound1)
    b1 = jax.random.uniform(k2, (1, num_hidden), jnp.float32, -bound1, bound1)
    w2 = jax.random.uniform(k3, (num_hidden, output_dim), jnp.float32,
                            -bound2, bound2)
    b2 = jax.random.uniform(k4, (1, output_dim), jnp.float32, -bound2, bound2)
    # BatchNorm1d affine params: gamma=1, beta=0 (PyTorch default init)
    gamma = jnp.ones((1, num_hidden), jnp.float32)
    beta = jnp.zeros((1, num_hidden), jnp.float32)
    return w1, b1, gamma, beta, w2, b2


def reference_forward(x, w1, b1, gamma, beta, w2, b2):
    """Pure-JAX f32 reference matching PyTorch training-mode forward."""
    h = x @ w1 + b1
    h = jnp.maximum(h, 0.0)
    mean = jnp.mean(h, axis=0, keepdims=True)
    var = jnp.mean((h - mean) ** 2, axis=0, keepdims=True)
    h = (h - mean) / jnp.sqrt(var + BN_EPS)
    h = h * gamma + beta
    return h @ w2 + b2


if __name__ == "__main__":
    input_dim, num_hidden, output_dim = 16, 32, 10
    batch = 20   # not a tile multiple -> exercises batch padding + row masking

    key = jax.random.PRNGKey(0)
    kx, kp = jax.random.split(key)
    x = jax.random.normal(kx, (batch, input_dim), jnp.float32)
    params = init_params(kp, input_dim, num_hidden, output_dim)

    ref = reference_forward(x, *params)

    # Fast path: whole batch fused in a single invocation.
    out_fast = jax.block_until_ready(digitnn_forward(x, *params))
    # Tiled path: force the two-call (stats -> fold -> apply) pipeline with a
    # small tile so the parallel grids are actually exercised.
    out_tiled = jax.block_until_ready(
        digitnn_forward(x, *params, tile_b=16, max_fast_rows=0))

    for name, out in (("fast", out_fast), ("tiled", out_tiled)):
        assert out.shape == (batch, output_dim)
        max_err = float(jnp.max(jnp.abs(out - ref)))
        # bf16 MXU operands with f32 accumulation -> relaxed tolerance vs f32 ref.
        assert jnp.allclose(out, ref, atol=5e-2, rtol=5e-2), (
            f"{name} path mismatch vs reference (max abs err={max_err})")

    print("KERNEL_OK")
</pallas_src>

<mosaic_0001>
module attributes {stable_mosaic.version = 11 : i64} {
  func.func @_fused_small_kernel(%arg0: i32, %arg1: memref<32x128xbf16, #tpu.memory_space<vmem>>, %arg2: memref<128x128xbf16, #tpu.memory_space<vmem>>, %arg3: memref<1x128xf32, #tpu.memory_space<vmem>>, %arg4: memref<1x128xf32, #tpu.memory_space<vmem>>, %arg5: memref<1x128xf32, #tpu.memory_space<vmem>>, %arg6: memref<128x128xbf16, #tpu.memory_space<vmem>>, %arg7: memref<1x128xf32, #tpu.memory_space<vmem>>, %arg8: memref<32x128xf32, #tpu.memory_space<vmem>>) attributes {dimension_semantics = [#tpu.dimension_semantics<arbitrary>], iteration_bounds = array<i64: 1>, scalar_prefetch = 0 : i64, scratch_operands = 0 : i64, tpu.core_type = #tpu.core_type<tc>, window_params = [{pipeline_mode = #tpu.pipeline_mode<synchronous>, transform_indices = @transform_0, window_bounds = array<i64: 32, 128>}, {pipeline_mode = #tpu.pipeline_mode<synchronous>, transform_indices = @transform_1, window_bounds = array<i64: 128, 128>}, {pipeline_mode = #tpu.pipeline_mode<synchronous>, transform_indices = @transform_2, window_bounds = array<i64: 1, 128>}, {pipeline_mode = #tpu.pipeline_mode<synchronous>, transform_indices = @transform_3, window_bounds = array<i64: 1, 128>}, {pipeline_mode = #tpu.pipeline_mode<synchronous>, transform_indices = @transform_4, window_bounds = array<i64: 1, 128>}, {pipeline_mode = #tpu.pipeline_mode<synchronous>, transform_indices = @transform_5, window_bounds = array<i64: 128, 128>}, {pipeline_mode = #tpu.pipeline_mode<synchronous>, transform_indices = @transform_6, window_bounds = array<i64: 1, 128>}, {pipeline_mode = #tpu.pipeline_mode<synchronous>, transform_indices = @transform_7, window_bounds = array<i64: 32, 128>}]} {
    %c0 = arith.constant 0 : index
    %c0_0 = arith.constant 0 : index
    %0 = vector.load %arg1[%c0, %c0_0] : memref<32x128xbf16, #tpu.memory_space<vmem>>, vector<32x128xbf16>
    %c0_1 = arith.constant 0 : index
    %c0_2 = arith.constant 0 : index
    %1 = vector.load %arg2[%c0_1, %c0_2] : memref<128x128xbf16, #tpu.memory_space<vmem>>, vector<128x128xbf16>
    %cst = arith.constant dense<0.000000e+00> : vector<32x128xf32>
    %2 = tpu.matmul %0, %1, %cst {dimension_numbers = #tpu.dot_dimension_numbers<[1], [0], [0], [1], [0, 0, 1, 1], [], []>} : vector<32x128xbf16>, vector<128x128xbf16>, vector<32x128xf32> -> vector<32x128xf32>
    %c0_3 = arith.constant 0 : index
    %c0_4 = arith.constant 0 : index
    %3 = vector.load %arg3[%c0_3, %c0_4] : memref<1x128xf32, #tpu.memory_space<vmem>>, vector<1x128xf32>
    %4 = vector.broadcast %3 : vector<1x128xf32> to vector<32x128xf32>
    %5 = arith.addf %2, %4 : vector<32x128xf32>
    %cst_5 = arith.constant 0.000000e+00 : f32
    %6 = vector.broadcast %cst_5 : f32 to vector<32x128xf32>
    %7 = arith.maximumf %5, %6 : vector<32x128xf32>
    %8 = tpu.iota {dimensions = array<i32: 0>} : vector<32x128xi32>
    %c20_i32 = arith.constant 20 : i32
    %9 = vector.broadcast %c20_i32 : i32 to vector<32x128xi32>
    %10 = arith.cmpi slt, %8, %9 : vector<32x128xi32>
    %cst_6 = arith.constant 0.000000e+00 : f32
    %11 = vector.broadcast %cst_6 : f32 to vector<32x128xf32>
    %12 = arith.select %10, %7, %11 : vector<32x128xi1>, vector<32x128xf32>
    %cst_7 = arith.constant dense<0.000000e+00> : vector<128xf32>
    %13 = vector.multi_reduction <add>, %12, %cst_7 [0] : vector<32x128xf32> to vector<128xf32>
    %14 = vector.shape_cast %13 : vector<128xf32> to vector<1x128xf32>
    %cst_8 = arith.constant 5.000000e-02 : f32
    %15 = vector.broadcast %cst_8 : f32 to vector<1x128xf32>
    %16 = arith.mulf %14, %15 : vector<1x128xf32>
    %17 = vector.broadcast %16 : vector<1x128xf32> to vector<32x128xf32>
    %18 = arith.subf %7, %17 : vector<32x128xf32>
    %cst_9 = arith.constant 0.000000e+00 : f32
    %19 = vector.broadcast %cst_9 : f32 to vector<32x128xf32>
    %20 = arith.select %10, %18, %19 : vector<32x128xi1>, vector<32x128xf32>
    %21 = arith.mulf %20, %20 : vector<32x128xf32>
    %cst_10 = arith.constant dense<0.000000e+00> : vector<128xf32>
    %22 = vector.multi_reduction <add>, %21, %cst_10 [0] : vector<32x128xf32> to vector<128xf32>
    %23 = vector.shape_cast %22 : vector<128xf32> to vector<1x128xf32>
    %cst_11 = arith.constant 5.000000e-02 : f32
    %24 = vector.broadcast %cst_11 : f32 to vector<1x128xf32>
    %25 = arith.mulf %23, %24 : vector<1x128xf32>
    %c0_12 = arith.constant 0 : index
    %c0_13 = arith.constant 0 : index
    %26 = vector.load %arg4[%c0_12, %c0_13] : memref<1x128xf32, #tpu.memory_space<vmem>>, vector<1x128xf32>
    %cst_14 = arith.constant 9.99999974E-6 : f32
    %27 = vector.broadcast %cst_14 : f32 to vector<1x128xf32>
    %28 = arith.addf %25, %27 : vector<1x128xf32>
    %29 = math.rsqrt %28 : vector<1x128xf32>
    %30 = arith.mulf %26, %29 : vector<1x128xf32>
    %c0_15 = arith.constant 0 : index
    %c0_16 = arith.constant 0 : index
    %31 = vector.load %arg5[%c0_15, %c0_16] : memref<1x128xf32, #tpu.memory_space<vmem>>, vector<1x128xf32>
    %32 = arith.mulf %16, %30 : vector<1x128xf32>
    %33 = arith.subf %31, %32 : vector<1x128xf32>
    %34 = vector.broadcast %30 : vector<1x128xf32> to vector<32x128xf32>
    %35 = arith.mulf %7, %34 : vector<32x128xf32>
    %36 = vector.broadcast %33 : vector<1x128xf32> to vector<32x128xf32>
    %37 = arith.addf %35, %36 : vector<32x128xf32>
    %38 = arith.truncf %37 : vector<32x128xf32> to vector<32x128xbf16>
    %c0_17 = arith.constant 0 : index
    %c0_18 = arith.constant 0 : index
    %39 = vector.load %arg6[%c0_17, %c0_18] : memref<128x128xbf16, #tpu.memory_space<vmem>>, vector<128x128xbf16>
    %cst_19 = arith.constant dense<0.000000e+00> : vector<32x128xf32>
    %40 = tpu.matmul %38, %39, %cst_19 {dimension_numbers = #tpu.dot_dimension_numbers<[1], [0], [0], [1], [0, 0, 1, 1], [], []>} : vector<32x128xbf16>, vector<128x128xbf16>, vector<32x128xf32> -> vector<32x128xf32>
    %c0_20 = arith.constant 0 : index
    %c0_21 = arith.constant 0 : index
    %41 = vector.load %arg7[%c0_20, %c0_21] : memref<1x128xf32, #tpu.memory_space<vmem>>, vector<1x128xf32>
    %42 = vector.broadcast %41 : vector<1x128xf32> to vector<32x128xf32>
    %43 = arith.addf %40, %42 : vector<32x128xf32>
    %c0_22 = arith.constant 0 : index
    %c0_23 = arith.constant 0 : index
    %44 = vector.load %arg8[%c0_22, %c0_23] : memref<32x128xf32, #tpu.memory_space<vmem>>, vector<32x128xf32>
    tpu.vector_store %arg8[%c0_22, %c0_23], %43 {strides = array<i32>} : memref<32x128xf32, #tpu.memory_space<vmem>>, vector<32x128xf32>,
    return
  }
  func.func @transform_0(%arg0: i32) -> (i32, i32) {
    %c0_i32 = arith.constant 0 : i32
    %c0_i32_0 = arith.constant 0 : i32
    %c0_i32_1 = arith.constant 0 : i32
    return %c0_i32, %c0_i32_0 : i32, i32
  }
  func.func @transform_1(%arg0: i32) -> (i32, i32) {
    %c0_i32 = arith.constant 0 : i32
    %c0_i32_0 = arith.constant 0 : i32
    %c0_i32_1 = arith.constant 0 : i32
    return %c0_i32, %c0_i32_0 : i32, i32
  }
  func.func @transform_2(%arg0: i32) -> (i32, i32) {
    %c0_i32 = arith.constant 0 : i32
    %c0_i32_0 = arith.constant 0 : i32
    %c0_i32_1 = arith.constant 0 : i32
    return %c0_i32, %c0_i32_0 : i32, i32
  }
  func.func @transform_3(%arg0: i32) -> (i32, i32) {
    %c0_i32 = arith.constant 0 : i32
    %c0_i32_0 = arith.constant 0 : i32
    %c0_i32_1 = arith.constant 0 : i32
    return %c0_i32, %c0_i32_0 : i32, i32
  }
  func.func @transform_4(%arg0: i32) -> (i32, i32) {
    %c0_i32 = arith.constant 0 : i32
    %c0_i32_0 = arith.constant 0 : i32
    %c0_i32_1 = arith.constant 0 : i32
    return %c0_i32, %c0_i32_0 : i32, i32
  }
  func.func @transform_5(%arg0: i32) -> (i32, i32) {
    %c0_i32 = arith.constant 0 : i32
    %c0_i32_0 = arith.constant 0 : i32
    %c0_i32_1 = arith.constant 0 : i32
    return %c0_i32, %c0_i32_0 : i32, i32
  }
  func.func @transform_6(%arg0: i32) -> (i32, i32) {
    %c0_i32 = arith.constant 0 : i32
    %c0_i32_0 = arith.constant 0 : i32
    %c0_i32_1 = arith.constant 0 : i32
    return %c0_i32, %c0_i32_0 : i32, i32
  }
  func.func @transform_7(%arg0: i32) -> (i32, i32) {
    %c0_i32 = arith.constant 0 : i32
    %c0_i32_0 = arith.constant 0 : i32
    %c0_i32_1 = arith.constant 0 : i32
    return %c0_i32, %c0_i32_0 : i32, i32
  }
}

</mosaic_0001>

<llo_original>
// kernel: tpu_custom_call.1
$region0: #{tpu_custom_call.1}
  #allocation0 [shape = 'u32[]', space=smem, size = 0x4, offset = 0x4, fixed_abs, tag = 'smem constant byte address 0x4 - core index']
  #allocation1 [shape = 'u32[144,128]{1,0:T(1,128)}', space=vmem, size = 0x12000, scoped, tag = 'internal scratch']
  %s0 = inlined_call_operand.hbm [shape: bf16[32,128], index: 0, kind: input, shape index: {}]
  %s1 = inlined_call_operand.hbm [shape: bf16[128,128], index: 1, kind: input, shape index: {}]
  %s2 = inlined_call_operand.vmem [shape: f32[1,128], index: 2, kind: input, shape index: {}]
  %s3 = inlined_call_operand.vmem [shape: f32[1,128], index: 3, kind: input, shape index: {}]
  %s4 = inlined_call_operand.vmem [shape: f32[1,128], index: 4, kind: input, shape index: {}]
  %s5 = inlined_call_operand.hbm [shape: bf16[128,128], index: 5, kind: input, shape index: {}]
  %s6 = inlined_call_operand.vmem [shape: f32[1,128], index: 6, kind: input, shape index: {}]
  %s7 = inlined_call_operand.hbm [shape: f32[32,128], index: 7, kind: output, shape index: {}]
  %s8 = sld [smem:[#allocation0]]
  $region50: #{tpu_custom_call.1} parent=0
    _
  %s10 = ssub.s32 1, %s8
  %s11 = scalar_select 0, %s10, %s8
  $region1: #{tpu_custom_call.1} parent=0
    #allocation2 [shape = 'u8[8192]{0}', space=vmem, size = 0x2000, scoped, tag = 'input window, operand 0, single buffered']
    #allocation3 [shape = 's32[1]{0}', space=sflag, size = 0x4, scoped, tag = 'scoped memory for tpu_custom_call.1']
    #allocation4 [shape = 's32[1]{0}', space=sflag, size = 0x4, scoped, tag = 'scoped memory for tpu_custom_call.1']
    #allocation5 [shape = 'u8[32768]{0}', space=vmem, size = 0x8000, scoped, tag = 'input window, operand 1, single buffered']
    #allocation6 [shape = 's32[1]{0}', space=sflag, size = 0x4, scoped, tag = 'scoped memory for tpu_custom_call.1']
    #allocation7 [shape = 'u8[32768]{0}', space=vmem, size = 0x8000, scoped, tag = 'input window, operand 5, single buffered']
    #allocation8 [shape = 'u8[16384]{0}', space=vmem, size = 0x4000, scoped, tag = 'output window, operand 0, single buffered']
    %12 = vsyncpa [#allocation3], 0
    %13 = vsyncpa [#allocation6], 0
    %14 = vsyncpa [#allocation4], 0
    // Predicated region
    $region2: #{tpu_custom_call.1} parent=1 // pred_check
      _
    $region3: #{tpu_custom_call.1} parent=1 // pred_check_branch
      %16 = sbr.rel (0) target = $region5
    $region4: #{tpu_custom_call.1} parent=1 // pred_region
      %s18 = ssub.s32 256, 256
      %19 = vsyncadd [#allocation3], %s18
      %s20 = sshll.u32 [#allocation2], 4
      %s21 = int_to_ptr.vmem [resolvable:$true] %s20
      %26 = dma.hbm_to_vmem [thread:$0]  %s0, 256, %s21, [#allocation3], 64, 64, 4
    $region5: #{tpu_custom_call.1} parent=1 // pred_fallthru
      _
    // Predicated region
    $region6: #{tpu_custom_call.1} parent=1 // pred_check
      _
    $region7: #{tpu_custom_call.1} parent=1 // pred_check_branch
      %28 = sbr.rel (0) target = $region9
    $region8: #{tpu_custom_call.1} parent=1 // pred_region
      %s30 = ssub.s32 1024, 1024
      %31 = vsyncadd [#allocation6], %s30
      %s32 = sshll.u32 [#allocation5], 4
      %s33 = int_to_ptr.vmem [resolvable:$true] %s32
      %38 = dma.hbm_to_vmem [thread:$0]  %s1, 1024, %s33, [#allocation6], 64, 64, 4
    $region9: #{tpu_custom_call.1} parent=1 // pred_fallthru
      _
    // Predicated region
    $region10: #{tpu_custom_call.1} parent=1 // pred_check
      _
    $region11: #{tpu_custom_call.1} parent=1 // pred_check_branch
      %40 = sbr.rel (0) target = $region13
    $region12: #{tpu_custom_call.1} parent=1 // pred_region
      _
    $region13: #{tpu_custom_call.1} parent=1 // pred_fallthru
      _
    // Predicated region
    $region14: #{tpu_custom_call.1} parent=1 // pred_check
      _
    $region15: #{tpu_custom_call.1} parent=1 // pred_check_branch
      %42 = sbr.rel (0) target = $region17
    $region16: #{tpu_custom_call.1} parent=1 // pred_region
      _
    $region17: #{tpu_custom_call.1} parent=1 // pred_fallthru
      _
    // Predicated region
    $region18: #{tpu_custom_call.1} parent=1 // pred_check
      _
    $region19: #{tpu_custom_call.1} parent=1 // pred_check_branch
      %44 = sbr.rel (0) target = $region21
    $region20: #{tpu_custom_call.1} parent=1 // pred_region
      _
    $region21: #{tpu_custom_call.1} parent=1 // pred_fallthru
      _
    // Predicated region
    $region22: #{tpu_custom_call.1} parent=1 // pred_check
      _
    $region23: #{tpu_custom_call.1} parent=1 // pred_check_branch
      %46 = sbr.rel (0) target = $region25
    $region24: #{tpu_custom_call.1} parent=1 // pred_region
      %s48 = ssub.s32 1024, 1024
      %49 = vsyncadd [#allocation6], %s48
      %s50 = sshll.u32 [#allocation7], 4
      %s51 = int_to_ptr.vmem [resolvable:$true] %s50
      %56 = dma.hbm_to_vmem [thread:$0]  %s5, 1024, %s51, [#allocation6], 64, 64, 4
    $region25: #{tpu_custom_call.1} parent=1 // pred_fallthru
      _
    // Predicated region
    $region26: #{tpu_custom_call.1} parent=1 // pred_check
      _
    $region27: #{tpu_custom_call.1} parent=1 // pred_check_branch
      %58 = sbr.rel (0) target = $region29
    $region28: #{tpu_custom_call.1} parent=1 // pred_region
      _
    $region29: #{tpu_custom_call.1} parent=1 // pred_fallthru
      _
    // Predicated region
    $region30: #{tpu_custom_call.1} parent=1 // pred_check
      _
    $region31: #{tpu_custom_call.1} parent=1 // pred_check_branch
      %60 = sbr.rel (0) target = $region33
    $region32: #{tpu_custom_call.1} parent=1 // pred_region
      %61 = dma.done [#allocation3], 256
    $region33: #{tpu_custom_call.1} parent=1 // pred_fallthru
      _
    // Predicated region
    $region34: #{tpu_custom_call.1} parent=1 // pred_check
      _
    $region35: #{tpu_custom_call.1} parent=1 // pred_check_branch
      %63 = sbr.rel (0) target = $region37
    $region36: #{tpu_custom_call.1} parent=1 // pred_region
      %64 = dma.done [#allocation6], 1024
    $region37: #{tpu_custom_call.1} parent=1 // pred_fallthru
      _
    // Predicated region
    $region38: #{tpu_custom_call.1} parent=1 // pred_check
      _
    $region39: #{tpu_custom_call.1} parent=1 // pred_check_branch
      %66 = sbr.rel (0) target = $region41
    $region40: #{tpu_custom_call.1} parent=1 // pred_region
      %67 = dma.done [#allocation6], 1024
    $region41: #{tpu_custom_call.1} parent=1 // pred_fallthru
      _
    %v69 = vld [vmem:[#allocation2] sm:$0xf]
    %v70 = vld [vmem:[#allocation2 + $0x4] sm:$0xf]
    %v71 = vld [vmem:[#allocation2 + $0x8] sm:$0xf]
    %v72 = vld [vmem:[#allocation2 + $0xc] sm:$0xf]
    %v73 = vld [vmem:[#allocation5] sm:$0xf]
    %v74 = vld [vmem:[#allocation5 + $0x4] sm:$0xf]
    %v75 = vld [vmem:[#allocation5 + $0x8] sm:$0xf]
    %v76 = vld [vmem:[#allocation5 + $0xc] sm:$0xf]
    %v77 = vld [vmem:[#allocation5 + $0x10] sm:$0xf]
    %v78 = vld [vmem:[#allocation5 + $0x14] sm:$0xf]
    %v79 = vld [vmem:[#allocation5 + $0x18] sm:$0xf]
    %v80 = vld [vmem:[#allocation5 + $0x1c] sm:$0xf]
    %v81 = vld [vmem:[#allocation5 + $0x20] sm:$0xf]
    %v82 = vld [vmem:[#allocation5 + $0x24] sm:$0xf]
    %v83 = vld [vmem:[#allocation5 + $0x28] sm:$0xf]
    %v84 = vld [vmem:[#allocation5 + $0x2c] sm:$0xf]
    %v85 = vld [vmem:[#allocation5 + $0x30] sm:$0xf]
    %v86 = vld [vmem:[#allocation5 + $0x34] sm:$0xf]
    %v87 = vld [vmem:[#allocation5 + $0x38] sm:$0xf]
    %v88 = vld [vmem:[#allocation5 + $0x3c] sm:$0xf]
    %v89 = vld [vmem:[%s2] sm:$0x1]
    %v91 = vlaneseq
    %v92 = vshrl.u32 %v91, 7
    %v93 = vsub.s32 0, %v92
    %v94 = vrot.slane %v89, %v93
    %v100 = vunpack.c.l.b16 %v69
    %v101 = vunpack.c.l.b16 %v70
    %v102 = vunpack.c.l.b16 %v71
    %v103 = vunpack.c.l.b16 %v72
    %v104 = vpack.c.b16 %v101, %v100
    %v105 = vpack.c.b16 %v103, %v102
    %v124 = vunpack.c.l.b16 %v73
    %v125 = vunpack.c.l.b16 %v74
    %v126 = vunpack.c.l.b16 %v75
    %v127 = vunpack.c.l.b16 %v76
    %v128 = vunpack.c.l.b16 %v77
    %v129 = vunpack.c.l.b16 %v78
    %v130 = vunpack.c.l.b16 %v79
    %v131 = vunpack.c.l.b16 %v80
    %v132 = vunpack.c.l.b16 %v81
    %v133 = vunpack.c.l.b16 %v82
    %v134 = vunpack.c.l.b16 %v83
    %v135 = vunpack.c.l.b16 %v84
    %v136 = vunpack.c.l.b16 %v85
    %v137 = vunpack.c.l.b16 %v86
    %v138 = vunpack.c.l.b16 %v87
    %v139 = vunpack.c.l.b16 %v88
    %v140 = vpack.c.b16 %v125, %v124
    %v141 = vpack.c.b16 %v127, %v126
    %v142 = vpack.c.b16 %v129, %v128
    %v143 = vpack.c.b16 %v131, %v130
    %v144 = vpack.c.b16 %v133, %v132
    %v145 = vpack.c.b16 %v135, %v134
    %v146 = vpack.c.b16 %v137, %v136
    %v147 = vpack.c.b16 %v139, %v138
    %156 = vmatprep.subr.bf16.mxu0 0
    %157 = vmatpush1.bf16.msra.mxu0 %v140
    %158 = vmatprep.subr.bf16.mxu0 0
    %159 = vmatpush1.bf16.msra.mxu0 %v141
    %160 = vmatprep.subr.bf16.mxu0 0
    %161 = vmatpush1.bf16.msra.mxu0 %v142
    %162 = vmatprep.subr.bf16.mxu0 0
    %163 = vmatpush1.bf16.msra.mxu0 %v143
    %164 = vmatprep.subr.bf16.mxu0 0
    %165 = vmatpush1.bf16.msra.mxu0 %v144
    %166 = vmatprep.subr.bf16.mxu0 0
    %167 = vmatpush1.bf16.msra.mxu0 %v145
    %168 = vmatprep.subr.bf16.mxu0 0
    %169 = vmatpush1.bf16.msra.mxu0 %v146
    %170 = vmatprep.subr.bf16.mxu0 0
    %171 = vmatpush1.bf16.msra.mxu0 %v147
    %172 = vmatprep.subr.bf16.mxu0 0
    %173 = vmatpush1.bf16.msra.mxu0 0
    %174 = vmatprep.subr.bf16.mxu0 0
    %175 = vmatpush1.bf16.msra.mxu0 0
    %176 = vmatprep.subr.bf16.mxu0 0
    %177 = vmatpush1.bf16.msra.mxu0 0
    %178 = vmatprep.subr.bf16.mxu0 0
    %179 = vmatpush1.bf16.msra.mxu0 0
    %180 = vmatprep.subr.bf16.mxu0 0
    %181 = vmatpush1.bf16.msra.mxu0 0
    %182 = vmatprep.subr.bf16.mxu0 0
    %183 = vmatpush1.bf16.msra.mxu0 0
    %184 = vmatprep.subr.bf16.mxu0 0
    %185 = vmatpush1.bf16.msra.mxu0 0
    %186 = vmatprep.subr.bf16.mxu0 0
    %187 = vmatpush1.bf16.msra.mxu0 0
    %188 = vmatprep.mubr.bf16.mxu0 0
    %189 = vmatmul.mubr.bf16.gmra.mrb[0].mxu0 %v104
    %v190 = vpop.f32.mrb[0].mxu0
    %v191 = vadd.f32 %v94, %v190
    %v192 = vpop.f32.mrb[0].mxu0
    %v193 = vpop.f32.mrb[0].mxu0
    %v194 = vadd.f32 %v94, %v193
    %v195 = vpop.f32.mrb[0].mxu0
    %196 = vmatprep.mubr.bf16.mxu0 0
    %197 = vmatmul.mubr.bf16.gmra.mrb[0].mxu0 %v105
    %v198 = vpop.f32.mrb[0].mxu0
    %v199 = vadd.f32 %v94, %v198
    %v200 = vpop.f32.mrb[0].mxu0
    %v201 = vpop.f32.mrb[0].mxu0
    %v202 = vadd.f32 %v94, %v201
    %v203 = vpop.f32.mrb[0].mxu0
    %204 = vdwg.mxu0
    %v205 = vmax.f32 %v191, 0.0
    %v206 = vmax.f32 %v194, 0.0
    %v207 = vmax.f32 %v199, 0.0
    %v208 = vmax.f32 %v202, 0.0
    %v209 = vlaneseq
    %v210 = vshrl.u32 %v209, 7
    %v211 = vadd.s32 %v210, 8
    %v212 = vadd.s32 %v210, 16
    %v213 = vadd.s32 %v210, 24
    %vm214 = vcmp.lt.s32.totalorder %v210, 20
    %vm215 = vcmp.lt.s32.totalorder %v211, 20
    %vm216 = vcmp.lt.s32.totalorder %v212, 20
    %vm217 = vcmp.lt.s32.totalorder %v213, 20
    %v218 = vsel %vm214, %v205, 0.0
    %v219 = vsel %vm215, %v206, 0.0
    %v220 = vsel %vm216, %v207, 0.0
    %v221 = vsel %vm217, %v208, 0.0
    %v222 = vadd.f32 %v218, %v219
    %v223 = vadd.f32 %v222, %v220
    %v224 = vadd.f32 %v223, %v221
    %v225 = vrot.slane %v224, 4
    %v226 = vadd.f32 %v224, %v225
    %v227 = vrot.slane %v226, 2
    %v228 = vadd.f32 %v226, %v227
    %v229 = vrot.slane %v228, 1
    %v230 = vadd.f32 %v228, %v229
    %v231 = vmul.f32 %v230, 0.05
    %v232 = vsub.f32 %v205, %v231
    %v233 = vsub.f32 %v206, %v231
    %v234 = vsub.f32 %v207, %v231
    %v235 = vsub.f32 %v208, %v231
    %v236 = vsel %vm214, %v232, 0.0
    %v237 = vsel %vm215, %v233, 0.0
    %v238 = vsel %vm216, %v234, 0.0
    %v239 = vsel %vm217, %v235, 0.0
    %v240 = vmul.f32 %v236, %v236
    %v241 = vmul.f32 %v237, %v237
    %v242 = vmul.f32 %v238, %v238
    %v243 = vmul.f32 %v239, %v239
    %v244 = vadd.f32 %v240, %v241
    %v245 = vadd.f32 %v244, %v242
    %v246 = vadd.f32 %v245, %v243
    %v247 = vrot.slane %v246, 4
    %v248 = vadd.f32 %v246, %v247
    %v249 = vrot.slane %v248, 2
    %v250 = vadd.f32 %v248, %v249
    %v251 = vrot.slane %v250, 1
    %v252 = vadd.f32 %v250, %v251
    %v253 = vmul.f32 %v252, 0.05
    %v254 = vld [vmem:[%s3] sm:$0x1]
    %v255 = vadd.f32 %v253, 1e-05
    %v256 = vrsqrt.pop %v255
    %v257 = vmul.f32 %v254, %v256
    %v258 = vld [vmem:[%s4] sm:$0x1]
    %v259 = vmul.f32 %v231, %v257
    %v260 = vsub.f32 %v258, %v259
    %v262 = vlaneseq
    %v263 = vshrl.u32 %v262, 7
    %v264 = vsub.s32 0, %v263
    %v265 = vrot.slane %v257, %v264
    %v267 = vmul.f32 %v205, %v265
    %v268 = vmul.f32 %v206, %v265
    %v269 = vmul.f32 %v207, %v265
    %v270 = vmul.f32 %v208, %v265
    %v272 = vlaneseq
    %v273 = vshrl.u32 %v272, 7
    %v274 = vsub.s32 0, %v273
    %v275 = vrot.slane %v260, %v274
    %v277 = vadd.f32 %v267, %v275
    %v278 = vadd.f32 %v268, %v275
    %v279 = vadd.f32 %v269, %v275
    %v280 = vadd.f32 %v270, %v275
    %v281 = vpack.c.bf16 %v278, %v277
    %v282 = vpack.c.bf16 %v280, %v279
    %v283 = vld [vmem:[#allocation7] sm:$0xf]
    %v284 = vld [vmem:[#allocation7 + $0x4] sm:$0xf]
    %v285 = vld [vmem:[#allocation7 + $0x8] sm:$0xf]
    %v286 = vld [vmem:[#allocation7 + $0xc] sm:$0xf]
    %v287 = vld [vmem:[#allocation7 + $0x10] sm:$0xf]
    %v288 = vld [vmem:[#allocation7 + $0x14] sm:$0xf]
    %v289 = vld [vmem:[#allocation7 + $0x18] sm:$0xf]
    %v290 = vld [vmem:[#allocation7 + $0x1c] sm:$0xf]
    %v291 = vld [vmem:[#allocation7 + $0x20] sm:$0xf]
    %v292 = vld [vmem:[#allocation7 + $0x24] sm:$0xf]
    %v293 = vld [vmem:[#allocation7 + $0x28] sm:$0xf]
    %v294 = vld [vmem:[#allocation7 + $0x2c] sm:$0xf]
    %v295 = vld [vmem:[#allocation7 + $0x30] sm:$0xf]
    %v296 = vld [vmem:[#allocation7 + $0x34] sm:$0xf]
    %v297 = vld [vmem:[#allocation7 + $0x38] sm:$0xf]
    %v298 = vld [vmem:[#allocation7 + $0x3c] sm:$0xf]
    %v299 = vld [vmem:[%s6] sm:$0x1]
    %v301 = vlaneseq
    %v302 = vshrl.u32 %v301, 7
    %v303 = vsub.s32 0, %v302
    %v304 = vrot.slane %v299, %v303
    %v322 = vunpack.c.l.b16 %v283
    %v323 = vunpack.c.l.b16 %v284
    %v324 = vunpack.c.l.b16 %v285
    %v325 = vunpack.c.l.b16 %v286
    %v326 = vunpack.c.l.b16 %v287
    %v327 = vunpack.c.l.b16 %v288
    %v328 = vunpack.c.l.b16 %v289
    %v329 = vunpack.c.l.b16 %v290
    %v330 = vunpack.c.l.b16 %v291
    %v331 = vunpack.c.l.b16 %v292
    %v332 = vunpack.c.l.b16 %v293
    %v333 = vunpack.c.l.b16 %v294
    %v334 = vunpack.c.l.b16 %v295
    %v335 = vunpack.c.l.b16 %v296
    %v336 = vunpack.c.l.b16 %v297
    %v337 = vunpack.c.l.b16 %v298
    %v338 = vpack.c.b16 %v323, %v322
    %v339 = vpack.c.b16 %v325, %v324
    %v340 = vpack.c.b16 %v327, %v326
    %v341 = vpack.c.b16 %v329, %v328
    %v342 = vpack.c.b16 %v331, %v330
    %v343 = vpack.c.b16 %v333, %v332
    %v344 = vpack.c.b16 %v335, %v334
    %v345 = vpack.c.b16 %v337, %v336
    %354 = vmatprep.subr.bf16.mxu0 0
    %355 = vmatpush1.bf16.msra.mxu0 %v338
    %356 = vmatprep.subr.bf16.mxu0 0
    %357 = vmatpush1.bf16.msra.mxu0 %v339
    %358 = vmatprep.subr.bf16.mxu0 0
    %359 = vmatpush1.bf16.msra.mxu0 %v340
    %360 = vmatprep.subr.bf16.mxu0 0
    %361 = vmatpush1.bf16.msra.mxu0 %v341
    %362 = vmatprep.subr.bf16.mxu0 0
    %363 = vmatpush1.bf16.msra.mxu0 %v342
    %364 = vmatprep.subr.bf16.mxu0 0
    %365 = vmatpush1.bf16.msra.mxu0 %v343
    %366 = vmatprep.subr.bf16.mxu0 0
    %367 = vmatpush1.bf16.msra.mxu0 %v344
    %368 = vmatprep.subr.bf16.mxu0 0
    %369 = vmatpush1.bf16.msra.mxu0 %v345
    %370 = vmatprep.subr.bf16.mxu0 0
    %371 = vmatpush1.bf16.msra.mxu0 0
    %372 = vmatprep.subr.bf16.mxu0 0
    %373 = vmatpush1.bf16.msra.mxu0 0
    %374 = vmatprep.subr.bf16.mxu0 0
    %375 = vmatpush1.bf16.msra.mxu0 0
    %376 = vmatprep.subr.bf16.mxu0 0
    %377 = vmatpush1.bf16.msra.mxu0 0
    %378 = vmatprep.subr.bf16.mxu0 0
    %379 = vmatpush1.bf16.msra.mxu0 0
    %380 = vmatprep.subr.bf16.mxu0 0
    %381 = vmatpush1.bf16.msra.mxu0 0
    %382 = vmatprep.subr.bf16.mxu0 0
    %383 = vmatpush1.bf16.msra.mxu0 0
    %384 = vmatprep.subr.bf16.mxu0 0
    %385 = vmatpush1.bf16.msra.mxu0 0
    %386 = vmatprep.mubr.bf16.mxu0 0
    %387 = vmatmul.mubr.bf16.gmra.mrb[0].mxu0 %v281
    %v388 = vpop.f32.mrb[0].mxu0
    %v389 = vadd.f32 %v304, %v388
    %v390 = vpop.f32.mrb[0].mxu0
    %v391 = vpop.f32.mrb[0].mxu0
    %v392 = vadd.f32 %v304, %v391
    %v393 = vpop.f32.mrb[0].mxu0
    %394 = vmatprep.mubr.bf16.mxu0 0
    %395 = vmatmul.mubr.bf16.gmra.mrb[0].mxu0 %v282
    %v396 = vpop.f32.mrb[0].mxu0
    %v397 = vadd.f32 %v304, %v396
    %v398 = vpop.f32.mrb[0].mxu0
    %v399 = vpop.f32.mrb[0].mxu0
    %v400 = vadd.f32 %v304, %v399
    %v401 = vpop.f32.mrb[0].mxu0
    %402 = vdwg.mxu0
    %403 = vst [vmem:[#allocation8] sm:$0xff] %v389
    %404 = vst [vmem:[#allocation8 + $0x8] sm:$0xff] %v392
    %405 = vst [vmem:[#allocation8 + $0x10] sm:$0xff] %v397
    %406 = vst [vmem:[#allocation8 + $0x18] sm:$0xff] %v400
    // Predicated region
    $region42: #{tpu_custom_call.1} parent=1 // pred_check
      _
    $region43: #{tpu_custom_call.1} parent=1 // pred_check_branch
      %408 = sbr.rel (0) target = $region45
    $region44: #{tpu_custom_call.1} parent=1 // pred_region
      %s410 = ssub.s32 512, 512
      %411 = vsyncadd [#allocation4], %s410
      %s412 = sshll.u32 [#allocation8], 4
      %s413 = int_to_ptr.vmem [resolvable:$true] %s412
      %418 = dma.vmem_to_hbm [thread:$0]  %s413, 512, %s7, [#allocation4], 128, 128, 8
    $region45: #{tpu_custom_call.1} parent=1 // pred_fallthru
      _
    // Predicated region
    $region46: #{tpu_custom_call.1} parent=1 // pred_check
      _
    $region47: #{tpu_custom_call.1} parent=1 // pred_check_branch
      %420 = sbr.rel (0) target = $region49
    $region48: #{tpu_custom_call.1} parent=1 // pred_region
      %421 = dma.done [#allocation4], 512
    $region49: #{tpu_custom_call.1} parent=1 // pred_fallthru
      _
    %422 = vsyncpa [#allocation3], 1
    %423 = vsyncpa [#allocation6], 1
    %424 = vsyncpa [#allocation4], 1

</llo_original>
